<compile_context>
chip_gen: v7x
topology: tpu7x:2x2x1
jax: 0.10.0
libtpu: 0.0.40
codegen_flags: <defaults>
</compile_context>

<pallas_src>
import functools

import jax
import jax.numpy as jnp
from jax.experimental import pallas as pl
from jax.experimental.pallas import tpu as pltpu


def _sinkhorn_kernel(q_ref, o_ref, *, num_iters: int, inv_eps: float,
                     k_true: int, b_total: int):
    q = q_ref[...].astype(jnp.float32)

    # Stability: subtract the global max before exp.  This is a pure global
    # scale on exp(Q/eps) and cancels exactly in the first column-sum
    # normalization (and in the global-sum normalization when num_iters == 0).
    m = jnp.max(q)
    p = jnp.exp((q - m) * inv_eps)                      # (B, K), never rewritten

    if num_iters == 0:
        # Literal reference path: Q /= sum(Q); Q *= B.
        o_ref[...] = (p * (float(b_total) / jnp.sum(p))).astype(o_ref.dtype)
        return

    kf = float(k_true)
    bf = float(b_total)

    def recip(x):
        # EUP approximate reciprocal refined with one Newton step (relative
        # error ~ delta^2); operands are only (1,K)/(B,1) vectors, so this is
        # essentially free and keeps the VALU path clear.
        r = pl.reciprocal(x, approx=True)
        return r * (2.0 - x * r)

    def col_update(u):
        # Column sums of diag(u) @ P  (== "sum_of_rows" of Q^T in the ref),
        # one fused multiply+reduce read pass over P.  v_new = 1 / (K * sums).
        s = jnp.sum(p if u is None else p * u, axis=0, keepdims=True)   # (1, K)
        return recip(s * kf)

    def row_update(v, *, last):
        # Row sums of P @ diag(v)  (== "sum over dim 0" of Q^T in the ref).
        s = jnp.sum(p * v, axis=1, keepdims=True)                        # (B, 1)
        if last:
            # The last iteration's *(1/B) cancels with the trailing *B of the
            # reference; the exact reciprocal makes every output row sum to 1.
            return pl.reciprocal(s, approx=False)
        return recip(s * bf)

    # Iteration 0: the reference's initial global-sum normalization cancels
    # with the first column normalization, so the implicit u starts as ones.
    v = col_update(None)
    u = row_update(v, last=(num_iters == 1))

    n_mid = num_iters - 2
    if n_mid > 0:
        if n_mid <= 4:
            for _ in range(n_mid):
                v = col_update(u)
                u = row_update(v, last=False)
        else:
            # Larger iteration counts: bounded live ranges via fori_loop.
            def body(_, uv):
                u_c, _v = uv
                v_n = col_update(u_c)
                return row_update(v_n, last=False), v_n
            u, v = jax.lax.fori_loop(0, n_mid, body, (u, v))

    if num_iters >= 2:
        v = col_update(u)
        u = row_update(v, last=True)

    # Single full-tile pass: materialize diag(u) P diag(v), cast, store.
    o_ref[...] = (p * u * v).astype(o_ref.dtype)


def _round_up(x: int, m: int) -> int:
    return (x + m - 1) // m * m


def sinkhorn2(Q: jax.Array, *, num_iters: int = 3, epsilon: float = 0.05,
              world_size: int = 1) -> jax.Array:
    """Pallas implementation of Sinkhorn2.forward.  Q: (B, K) -> (B, K)."""
    B, K = Q.shape
    itemsize = Q.dtype.itemsize

    # VMEM footprint estimate (allocations are (8,128)-tile padded): input and
    # output at their true dtype plus ~2 resident f32 working copies of P.
    Bp, Kp = _round_up(B, 8), _round_up(K, 128)
    vmem_need = Bp * Kp * (2 * itemsize + 2 * 4)

    try:
        vmem_cap = int(pltpu.get_tpu_info().vmem_capacity_bytes)
    except Exception:
        vmem_cap = 64 * 1024 * 1024          # conservative: v7x per-TC VMEM
    headroom = 8 * 1024 * 1024
    if vmem_need > vmem_cap - headroom:
        # TODO(synk): B-tiled two-pass-per-iteration variant (persistent (1,K)
        # column-sum / v scratch, grid over B marked "parallel" so v7x's second
        # TensorCore is used) for Q that does not fit resident in VMEM.
        raise NotImplementedError("Q too large for the single-block Sinkhorn kernel")

    compiler_params = None
    if vmem_need > 16 * 1024 * 1024:         # above the smallest default scoped limit
        compiler_params = pltpu.CompilerParams(
            vmem_limit_bytes=int(min(vmem_need + (4 << 20), vmem_cap - (4 << 20))))

    cost = pl.CostEstimate(
        flops=(4 * int(num_iters) + 3) * B * K,
        transcendentals=B * K,
        bytes_accessed=2 * B * K * itemsize,
    )

    kernel = functools.partial(
        _sinkhorn_kernel,
        num_iters=int(num_iters),
        inv_eps=float(1.0 / epsilon),
        k_true=int(K),
        b_total=int(B * world_size),
    )
    # No grid / no BlockSpec tiling: whole problem resident in VMEM, single
    # invocation.  Q is passed at its true shape (Mosaic masks the unaligned
    # reductions/stores), avoiding wrapper-side pad/slice HBM round trips.
    return pl.pallas_call(
        kernel,
        out_shape=jax.ShapeDtypeStruct((B, K), Q.dtype),
        compiler_params=compiler_params,
        cost_estimate=cost,
    )(Q)


def _sinkhorn2_ref(Q, *, num_iters=3, epsilon=0.05, world_size=1):
    """Pure-JAX reference mirroring the PyTorch code literally."""
    Qt = jnp.exp(Q.astype(jnp.float32) / epsilon).T     # (K, B)
    B = Qt.shape[1] * world_size
    K = Qt.shape[0]
    Qt = Qt / jnp.sum(Qt)
    for _ in range(num_iters):
        Qt = Qt / jnp.sum(Qt, axis=1, keepdims=True)
        Qt = Qt / K
        Qt = Qt / jnp.sum(Qt, axis=0, keepdims=True)
        Qt = Qt / B
    Qt = Qt * B
    return Qt.T                                          # (B, K)


if __name__ == "__main__":
    key0, key1 = jax.random.split(jax.random.PRNGKey(0))

    # Test 1: aligned shape (one sublane tile x one lane tile), default iters.
    Bsz, Kproto = 8, 128
    Q = jax.random.normal(key0, (Bsz, Kproto), dtype=jnp.float32)
    out = jax.block_until_ready(sinkhorn2(Q, num_iters=3, epsilon=0.05))
    ref = _sinkhorn2_ref(Q, num_iters=3, epsilon=0.05)
    assert out.shape == (Bsz, Kproto)
    assert jnp.allclose(out, ref, rtol=5e-4, atol=1e-6), "mismatch vs reference"
    # Structural invariant of Sinkhorn2: each sample's row sums to 1.
    assert jnp.allclose(out.sum(axis=1), 1.0, atol=1e-4), "row sums != 1"

    # Test 2: unaligned shape exercises the masked (no-pad) reductions/stores.
    B2, K2 = 6, 200
    Q2 = jax.random.normal(key1, (B2, K2), dtype=jnp.float32)
    out2 = jax.block_until_ready(sinkhorn2(Q2, num_iters=3, epsilon=0.05))
    ref2 = _sinkhorn2_ref(Q2, num_iters=3, epsilon=0.05)
    assert out2.shape == (B2, K2)
    assert bool(jnp.isfinite(out2).all()), "non-finite values from unaligned path"
    assert jnp.allclose(out2, ref2, rtol=5e-4, atol=1e-6), "unaligned mismatch"

    # Test 3: larger iteration count exercises the fori_loop path.
    out3 = jax.block_until_ready(sinkhorn2(Q, num_iters=7, epsilon=0.05))
    ref3 = _sinkhorn2_ref(Q, num_iters=7, epsilon=0.05)
    assert jnp.allclose(out3, ref3, rtol=5e-4, atol=1e-6), "fori_loop mismatch"

    # Test 4: bf16 I/O smoke test (cast path); loose check only.
    Qb = Q.astype(jnp.bfloat16)
    out4 = jax.block_until_ready(sinkhorn2(Qb, num_iters=3, epsilon=0.05))
    assert out4.dtype == jnp.bfloat16 and out4.shape == (Bsz, Kproto)
    assert bool(jnp.isfinite(out4.astype(jnp.float32)).all()), "bf16 non-finite"

    print("KERNEL_OK")
</pallas_src>

<mosaic_0001>
module attributes {stable_mosaic.version = 11 : i64} {
  func.func @_sinkhorn_kernel(%arg0: memref<8x128xf32, #tpu.memory_space<vmem>>, %arg1: memref<8x128xf32, #tpu.memory_space<vmem>>) attributes {dimension_semantics = [], scalar_prefetch = 0 : i64, scratch_operands = 0 : i64, tpu.core_type = #tpu.core_type<tc>} {
    %c0 = arith.constant 0 : index
    %c0_0 = arith.constant 0 : index
    %0 = vector.load %arg0[%c0, %c0_0] : memref<8x128xf32, #tpu.memory_space<vmem>>, vector<8x128xf32>
    %1 = vector.shape_cast %0 : vector<8x128xf32> to vector<1x8x128xf32>
    %cst = arith.constant dense<0xFF800000> : vector<1xf32>
    %2 = vector.multi_reduction <maximumf>, %1, %cst [1, 2] : vector<1x8x128xf32> to vector<1xf32>
    %3 = vector.shape_cast %2 : vector<1xf32> to vector<1x1x1xf32>
    %4 = vector.extract %3[0, 0, 0] : f32 from vector<1x1x1xf32>
    %5 = vector.broadcast %4 : f32 to vector<8x128xf32>
    %6 = arith.subf %0, %5 : vector<8x128xf32>
    %cst_1 = arith.constant 2.000000e+01 : f32
    %7 = vector.broadcast %cst_1 : f32 to vector<8x128xf32>
    %8 = arith.mulf %6, %7 : vector<8x128xf32>
    %9 = math.exp %8 : vector<8x128xf32>
    %cst_2 = arith.constant dense<0.000000e+00> : vector<128xf32>
    %10 = vector.multi_reduction <add>, %9, %cst_2 [0] : vector<8x128xf32> to vector<128xf32>
    %11 = vector.shape_cast %10 : vector<128xf32> to vector<1x128xf32>
    %cst_3 = arith.constant 1.280000e+02 : f32
    %12 = vector.broadcast %cst_3 : f32 to vector<1x128xf32>
    %13 = arith.mulf %11, %12 : vector<1x128xf32>
    %14 = tpu.reciprocal %13 {approx = true} : vector<1x128xf32> -> vector<1x128xf32>
    %15 = arith.mulf %13, %14 : vector<1x128xf32>
    %cst_4 = arith.constant 2.000000e+00 : f32
    %16 = vector.broadcast %cst_4 : f32 to vector<1x128xf32>
    %17 = arith.subf %16, %15 : vector<1x128xf32>
    %18 = arith.mulf %14, %17 : vector<1x128xf32>
    %19 = vector.broadcast %18 : vector<1x128xf32> to vector<8x128xf32>
    %20 = arith.mulf %9, %19 : vector<8x128xf32>
    %cst_5 = arith.constant dense<0.000000e+00> : vector<8xf32>
    %21 = vector.multi_reduction <add>, %20, %cst_5 [1] : vector<8x128xf32> to vector<8xf32>
    %22 = vector.shape_cast %21 : vector<8xf32> to vector<8x1xf32>
    %cst_6 = arith.constant 8.000000e+00 : f32
    %23 = vector.broadcast %cst_6 : f32 to vector<8x1xf32>
    %24 = arith.mulf %22, %23 : vector<8x1xf32>
    %25 = tpu.reciprocal %24 {approx = true} : vector<8x1xf32> -> vector<8x1xf32>
    %26 = arith.mulf %24, %25 : vector<8x1xf32>
    %cst_7 = arith.constant 2.000000e+00 : f32
    %27 = vector.broadcast %cst_7 : f32 to vector<8x1xf32>
    %28 = arith.subf %27, %26 : vector<8x1xf32>
    %29 = arith.mulf %25, %28 : vector<8x1xf32>
    %30 = vector.broadcast %29 : vector<8x1xf32> to vector<8x128xf32>
    %31 = arith.mulf %9, %30 : vector<8x128xf32>
    %cst_8 = arith.constant dense<0.000000e+00> : vector<128xf32>
    %32 = vector.multi_reduction <add>, %31, %cst_8 [0] : vector<8x128xf32> to vector<128xf32>
    %33 = vector.shape_cast %32 : vector<128xf32> to vector<1x128xf32>
    %cst_9 = arith.constant 1.280000e+02 : f32
    %34 = vector.broadcast %cst_9 : f32 to vector<1x128xf32>
    %35 = arith.mulf %33, %34 : vector<1x128xf32>
    %36 = tpu.reciprocal %35 {approx = true} : vector<1x128xf32> -> vector<1x128xf32>
    %37 = arith.mulf %35, %36 : vector<1x128xf32>
    %cst_10 = arith.constant 2.000000e+00 : f32
    %38 = vector.broadcast %cst_10 : f32 to vector<1x128xf32>
    %39 = arith.subf %38, %37 : vector<1x128xf32>
    %40 = arith.mulf %36, %39 : vector<1x128xf32>
    %41 = vector.broadcast %40 : vector<1x128xf32> to vector<8x128xf32>
    %42 = arith.mulf %9, %41 : vector<8x128xf32>
    %cst_11 = arith.constant dense<0.000000e+00> : vector<8xf32>
    %43 = vector.multi_reduction <add>, %42, %cst_11 [1] : vector<8x128xf32> to vector<8xf32>
    %44 = vector.shape_cast %43 : vector<8xf32> to vector<8x1xf32>
    %cst_12 = arith.constant 8.000000e+00 : f32
    %45 = vector.broadcast %cst_12 : f32 to vector<8x1xf32>
    %46 = arith.mulf %44, %45 : vector<8x1xf32>
    %47 = tpu.reciprocal %46 {approx = true} : vector<8x1xf32> -> vector<8x1xf32>
    %48 = arith.mulf %46, %47 : vector<8x1xf32>
    %cst_13 = arith.constant 2.000000e+00 : f32
    %49 = vector.broadcast %cst_13 : f32 to vector<8x1xf32>
    %50 = arith.subf %49, %48 : vector<8x1xf32>
    %51 = arith.mulf %47, %50 : vector<8x1xf32>
    %52 = vector.broadcast %51 : vector<8x1xf32> to vector<8x128xf32>
    %53 = arith.mulf %9, %52 : vector<8x128xf32>
    %cst_14 = arith.constant dense<0.000000e+00> : vector<128xf32>
    %54 = vector.multi_reduction <add>, %53, %cst_14 [0] : vector<8x128xf32> to vector<128xf32>
    %55 = vector.shape_cast %54 : vector<128xf32> to vector<1x128xf32>
    %cst_15 = arith.constant 1.280000e+02 : f32
    %56 = vector.broadcast %cst_15 : f32 to vector<1x128xf32>
    %57 = arith.mulf %55, %56 : vector<1x128xf32>
    %58 = tpu.reciprocal %57 {approx = true} : vector<1x128xf32> -> vector<1x128xf32>
    %59 = arith.mulf %57, %58 : vector<1x128xf32>
    %cst_16 = arith.constant 2.000000e+00 : f32
    %60 = vector.broadcast %cst_16 : f32 to vector<1x128xf32>
    %61 = arith.subf %60, %59 : vector<1x128xf32>
    %62 = arith.mulf %58, %61 : vector<1x128xf32>
    %63 = vector.broadcast %62 : vector<1x128xf32> to vector<8x128xf32>
    %64 = arith.mulf %9, %63 : vector<8x128xf32>
    %cst_17 = arith.constant dense<0.000000e+00> : vector<8xf32>
    %65 = vector.multi_reduction <add>, %64, %cst_17 [1] : vector<8x128xf32> to vector<8xf32>
    %66 = vector.shape_cast %65 : vector<8xf32> to vector<8x1xf32>
    %67 = tpu.reciprocal %66 : vector<8x1xf32> -> vector<8x1xf32>
    %68 = vector.broadcast %67 : vector<8x1xf32> to vector<8x128xf32>
    %69 = arith.mulf %9, %68 : vector<8x128xf32>
    %70 = vector.broadcast %62 : vector<1x128xf32> to vector<8x128xf32>
    %71 = arith.mulf %69, %70 : vector<8x128xf32>
    %c0_18 = arith.constant 0 : index
    %c0_19 = arith.constant 0 : index
    %72 = vector.load %arg1[%c0_18, %c0_19] : memref<8x128xf32, #tpu.memory_space<vmem>>, vector<8x128xf32>
    tpu.vector_store %arg1[%c0_18, %c0_19], %71 {strides = array<i32>} : memref<8x128xf32, #tpu.memory_space<vmem>>, vector<8x128xf32>,
    return
  }
}

</mosaic_0001>

<llo_original>
// kernel: tpu_custom_call.1
$region0: #{tpu_custom_call.1}
  #allocation0 [shape = 'u32[]', space=smem, size = 0x4, offset = 0x4, fixed_abs, tag = 'smem constant byte address 0x4 - core index']
  #allocation1 [shape = 'u32[144,128]{1,0:T(1,128)}', space=vmem, size = 0x12000, scoped, tag = 'internal scratch']
  %s0 = inlined_call_operand.hbm [shape: f32[8,128], index: 0, kind: input, shape index: {}]
  %s1 = inlined_call_operand.hbm [shape: f32[8,128], index: 1, kind: output, shape index: {}]
  %s2 = sld [smem:[#allocation0]]
  $region18: #{tpu_custom_call.1} parent=0
    _
  %s4 = ssub.s32 1, %s2
  %s5 = scalar_select 0, %s4, %s2
  $region1: #{tpu_custom_call.1} parent=0
    #allocation2 [shape = 'u8[4096]{0}', space=vmem, size = 0x1000, scoped, tag = 'input window, operand 0, single buffered']
    #allocation3 [shape = 's32[1]{0}', space=sflag, size = 0x4, scoped, tag = 'scoped memory for tpu_custom_call.1']
    #allocation4 [shape = 's32[1]{0}', space=sflag, size = 0x4, scoped, tag = 'scoped memory for tpu_custom_call.1']
    #allocation5 [shape = 'u8[4096]{0}', space=vmem, size = 0x1000, scoped, tag = 'output window, operand 0, single buffered']
    %6 = vsyncpa [#allocation3], 0
    %7 = vsyncpa [#allocation4], 0
    // Predicated region
    $region2: #{tpu_custom_call.1} parent=1 // pred_check
      _
    $region3: #{tpu_custom_call.1} parent=1 // pred_check_branch
      %9 = sbr.rel (0) target = $region5
    $region4: #{tpu_custom_call.1} parent=1 // pred_region
      %s11 = ssub.s32 128, 128
      %12 = vsyncadd [#allocation3], %s11
      %s14 = sshll.u32 [#allocation2], 4
      %s15 = int_to_ptr.vmem [resolvable:$true] %s14
      %17 = dma.hbm_to_vmem [thread:$0]  %s0, 128, %s15, [#allocation3]
    $region5: #{tpu_custom_call.1} parent=1 // pred_fallthru
      _
    // Predicated region
    $region6: #{tpu_custom_call.1} parent=1 // pred_check
      _
    $region7: #{tpu_custom_call.1} parent=1 // pred_check_branch
      %19 = sbr.rel (0) target = $region9
    $region8: #{tpu_custom_call.1} parent=1 // pred_region
      %20 = dma.done [#allocation3], 128
    $region9: #{tpu_custom_call.1} parent=1 // pred_fallthru
      _
    %v21 = vld [vmem:[#allocation2] sm:$0xff]
    %22 = vmax.xlane.f32.xlu0 %v21
    %v23 = vpop.xlane.xlu0 %22
    %v24 = vrot.slane %v23, 4
    %v25 = vmax.f32 %v23, %v24
    %v26 = vrot.slane %v25, 2
    %v27 = vmax.f32 %v25, %v26
    %v28 = vrot.slane %v27, 1
    %v29 = vmax.f32 %v27, %v28
    %s30 = vtos %v29
    %v31 = vstv %s30
    %v32 = vsub.f32 %v21, %v31
    %v33 = vmul.f32 %v32, 20.0
    %v34 = vmul.f32 %v33, 1.442695
    %v35 = vpow.pop %v34
    %v36 = vrot.slane %v35, 4
    %v37 = vadd.f32 %v35, %v36
    %v38 = vrot.slane %v37, 2
    %v39 = vadd.f32 %v37, %v38
    %v40 = vrot.slane %v39, 1
    %v41 = vadd.f32 %v39, %v40
    %v42 = vmul.f32 %v41, 128.0
    %v43 = vrcp.pop %v42
    %v44 = vmul.f32 %v42, %v43
    %v45 = vsub.f32 2.0, %v44
    %v46 = vmul.f32 %v43, %v45
    %v47 = vmul.f32 %v35, %v46
    %48 = vadd.xlane.f32.xlu0 %v47
    %v49 = vpop.xlane.xlu0 %48
    %v50 = vmul.f32 %v49, 8.0
    %v51 = vrcp.pop %v50
    %v52 = vmul.f32 %v50, %v51
    %v53 = vsub.f32 2.0, %v52
    %v54 = vmul.f32 %v51, %v53
    %v55 = vmul.f32 %v35, %v54
    %v56 = vrot.slane %v55, 4
    %v57 = vadd.f32 %v55, %v56
    %v58 = vrot.slane %v57, 2
    %v59 = vadd.f32 %v57, %v58
    %v60 = vrot.slane %v59, 1
    %v61 = vadd.f32 %v59, %v60
    %v62 = vmul.f32 %v61, 128.0
    %v63 = vrcp.pop %v62
    %v64 = vmul.f32 %v62, %v63
    %v65 = vsub.f32 2.0, %v64
    %v66 = vmul.f32 %v63, %v65
    %v67 = vmul.f32 %v35, %v66
    %68 = vadd.xlane.f32.xlu0 %v67
    %v69 = vpop.xlane.xlu0 %68
    %v70 = vmul.f32 %v69, 8.0
    %v71 = vrcp.pop %v70
    %v72 = vmul.f32 %v70, %v71
    %v73 = vsub.f32 2.0, %v72
    %v74 = vmul.f32 %v71, %v73
    %v75 = vmul.f32 %v35, %v74
    %v76 = vrot.slane %v75, 4
    %v77 = vadd.f32 %v75, %v76
    %v78 = vrot.slane %v77, 2
    %v79 = vadd.f32 %v77, %v78
    %v80 = vrot.slane %v79, 1
    %v81 = vadd.f32 %v79, %v80
    %v82 = vmul.f32 %v81, 128.0
    %v83 = vrcp.pop %v82
    %v84 = vmul.f32 %v82, %v83
    %v85 = vsub.f32 2.0, %v84
    %v86 = vmul.f32 %v83, %v85
    %v87 = vmul.f32 %v35, %v86
    %88 = vadd.xlane.f32.xlu0 %v87
    %v89 = vpop.xlane.xlu0 %88
    %v90 = vrcp.pop %v89
    %v91 = vmul.f32 %v35, %v90
    %v92 = vmul.f32 %v91, %v86
    %93 = vst [vmem:[#allocation5] sm:$0xff] %v92
    // Predicated region
    $region10: #{tpu_custom_call.1} parent=1 // pred_check
      _
    $region11: #{tpu_custom_call.1} parent=1 // pred_check_branch
      %95 = sbr.rel (0) target = $region13
    $region12: #{tpu_custom_call.1} parent=1 // pred_region
      %s97 = ssub.s32 128, 128
      %98 = vsyncadd [#allocation4], %s97
      %s100 = sshll.u32 [#allocation5], 4
      %s101 = int_to_ptr.vmem [resolvable:$true] %s100
      %103 = dma.vmem_to_hbm [thread:$0]  %s101, 128, %s1, [#allocation4]
    $region13: #{tpu_custom_call.1} parent=1 // pred_fallthru
      _
    // Predicated region
    $region14: #{tpu_custom_call.1} parent=1 // pred_check
      _
    $region15: #{tpu_custom_call.1} parent=1 // pred_check_branch
      %105 = sbr.rel (0) target = $region17
    $region16: #{tpu_custom_call.1} parent=1 // pred_region
      %106 = dma.done [#allocation4], 128
    $region17: #{tpu_custom_call.1} parent=1 // pred_fallthru
      _
    %107 = vsyncpa [#allocation3], 1
    %108 = vsyncpa [#allocation4], 1

</llo_original>
